<compile_context>
chip_gen: v7x
topology: tpu7x:2x2x1
jax: 0.10.0
libtpu: 0.0.40
codegen_flags: <defaults>
</compile_context>

<pallas_src>
import math
import functools

import jax
import jax.numpy as jnp
from jax import lax
from jax.experimental import pallas as pl
from jax.experimental.pallas import tpu as pltpu


def _make_pe_table(d_model, max_len=128, dtype=jnp.float32):
    """Builds the (max_len, 1, d_model) sinusoidal table, matching torch init."""
    position = jnp.arange(max_len, dtype=jnp.float32)[:, None]                # (L, 1)
    div_term = jnp.exp(
        jnp.arange(0, d_model, 2, dtype=jnp.float32) * (-math.log(10000.0) / d_model)
    )                                                                          # (D/2,)
    pe = jnp.zeros((max_len, d_model), dtype=jnp.float32)
    pe = pe.at[:, 0::2].set(jnp.sin(position * div_term))
    pe = pe.at[:, 1::2].set(jnp.cos(position * div_term))
    return pe[:, None, :].astype(dtype)                                        # (L, 1, D)


def _hash_u32(x):
    """lowbias32 finalizer: stateless uint32->uint32 hash, VPU-only ops."""
    x = x ^ (x >> 16)
    x = x * jnp.uint32(0x7FEB352D)
    x = x ^ (x >> 15)
    x = x * jnp.uint32(0x846CA68B)
    x = x ^ (x >> 16)
    return x


def _pos_enc_kernel(seed_ref, x_ref, pe_ref, o_ref, *, p, training, block_rows):
    # x_ref: (tS, B, D) VMEM, pe_ref: (tS, 1, D) VMEM, seed_ref: SMEM int32[1]
    y = x_ref[...].astype(jnp.float32) + pe_ref[...].astype(jnp.float32)  # bcast over B

    if training and p > 0.0:
        tS, B, D = x_ref.shape
        # Global element coordinates -> mask is independent of the tiling.
        s_loc = lax.broadcasted_iota(jnp.int32, (tS, B, D), 0)
        b_idx = lax.broadcasted_iota(jnp.int32, (tS, B, D), 1)
        d_idx = lax.broadcasted_iota(jnp.int32, (tS, B, D), 2)
        s_glb = s_loc + pl.program_id(0) * block_rows
        flat = (s_glb * B + b_idx) * D + d_idx                       # int32
        seed_u = seed_ref[0].astype(jnp.uint32) * jnp.uint32(0x9E3779B9)
        bits = _hash_u32(flat.astype(jnp.uint32) ^ seed_u)           # uint32 bits

        # Inverted dropout: keep with prob (1-p), scale kept values by 1/(1-p).
        threshold = jnp.uint32(min(int(round(p * (2.0 ** 32))), 2 ** 32 - 1))
        keep = bits >= threshold
        scale = jnp.float32(1.0 / (1.0 - p))
        y = jnp.where(keep, scale, jnp.float32(0.0)) * y             # select + mul

    o_ref[...] = y.astype(o_ref.dtype)


def positional_encoding_vaswani(x, pe_table, seed, *, p=0.1, training=True,
                                block_rows=None, block_bytes=2 * 1024 * 1024):
    """x: (S, B, D); pe_table: (max_len, 1, D); seed: int32 scalar/[1]."""
    S, B, D = x.shape
    pe = pe_table[:S].astype(x.dtype)          # (S, 1, D) -- the pe[:x.size(0)] slice

    if training and p >= 1.0:                  # guard: everything dropped
        return jnp.zeros_like(x)

    itemsize = jnp.dtype(x.dtype).itemsize
    if block_rows is None:
        rows = max(1, block_bytes // max(1, B * D * itemsize))
        rows = max(8, (rows // 8) * 8)         # multiple of 8 sublane rows
        block_rows = min(S, rows)
    block_rows = max(1, min(block_rows, S))
    grid = (pl.cdiv(S, block_rows),)

    seed_arr = jnp.asarray(seed, dtype=jnp.int32).reshape((1,))
    kernel = functools.partial(_pos_enc_kernel, p=float(p), training=bool(training),
                               block_rows=block_rows)

    cost = pl.CostEstimate(
        flops=S * B * D,
        transcendentals=0,
        bytes_accessed=2 * S * B * D * itemsize + S * D * itemsize,
    )

    return pl.pallas_call(
        kernel,
        out_shape=jax.ShapeDtypeStruct((S, B, D), x.dtype),
        grid_spec=pltpu.PrefetchScalarGridSpec(
            num_scalar_prefetch=1,             # seed lands in SMEM
            grid=grid,
            in_specs=[
                pl.BlockSpec((block_rows, B, D), lambda i, seed: (i, 0, 0)),
                pl.BlockSpec((block_rows, 1, D), lambda i, seed: (i, 0, 0)),
            ],
            out_specs=pl.BlockSpec((block_rows, B, D), lambda i, seed: (i, 0, 0)),
        ),
        compiler_params=pltpu.CompilerParams(
            dimension_semantics=("parallel",),     # tiles independent; megacore-safe
            vmem_limit_bytes=64 * 1024 * 1024,
        ),
        cost_estimate=cost,
    )(seed_arr, x, pe)


if __name__ == "__main__":
    d_model = 128      # lane-dense last dim (multiple of 128)
    seq_len = 64
    batch = 4
    max_len = 128
    p_drop = 0.1

    key = jax.random.PRNGKey(0)
    x = jax.random.normal(key, (seq_len, batch, d_model), dtype=jnp.float32)

    pe_table = _make_pe_table(d_model, max_len=max_len, dtype=jnp.float32)
    seed = jnp.array([0], dtype=jnp.int32)

    # Training-mode forward (dropout active); block_rows=16 -> grid=(4,) exercises tiling.
    out_train = positional_encoding_vaswani(x, pe_table, seed, p=p_drop,
                                            training=True, block_rows=16)
    out_train = jax.block_until_ready(out_train)

    # Eval-mode forward (dropout = identity) — deterministic check vs reference.
    out_eval = positional_encoding_vaswani(x, pe_table, seed, p=p_drop,
                                           training=False, block_rows=16)
    out_eval = jax.block_until_ready(out_eval)

    ref_eval = x + pe_table[:seq_len]
    assert out_train.shape == (seq_len, batch, d_model)
    assert jnp.allclose(out_eval, ref_eval, atol=1e-6), "eval-mode mismatch"

    # Dropout semantics: every element is either 0 or (x+pe)/(1-p).
    scaled = ref_eval / (1.0 - p_drop)
    ok = jnp.isclose(out_train, scaled, atol=1e-5) | jnp.isclose(out_train, 0.0, atol=1e-7)
    assert bool(jnp.all(ok)), "dropout semantics mismatch"
    drop_frac = float(jnp.mean((out_train == 0.0).astype(jnp.float32)))
    assert 0.02 < drop_frac < 0.3, f"unexpected drop fraction {drop_frac}"

    print("KERNEL_OK")
</pallas_src>

<mosaic_0001>
module attributes {stable_mosaic.version = 11 : i64} {
  func.func @_pos_enc_kernel(%arg0: i32, %arg1: memref<1xi32, #tpu.memory_space<smem>>, %arg2: memref<16x4x128xf32, #tpu.memory_space<vmem>>, %arg3: memref<16x1x128xf32, #tpu.memory_space<vmem>>, %arg4: memref<16x4x128xf32, #tpu.memory_space<vmem>>) attributes {dimension_semantics = [#tpu.dimension_semantics<parallel>], iteration_bounds = array<i64: 4>, scalar_prefetch = 1 : i64, scratch_operands = 0 : i64, tpu.core_type = #tpu.core_type<tc>, window_params = [{transform_indices = @transform_0, window_bounds = array<i64: 16, 4, 128>}, {transform_indices = @transform_1, window_bounds = array<i64: 16, 1, 128>}, {transform_indices = @transform_2, window_bounds = array<i64: 16, 4, 128>}]} {
    %c0 = arith.constant 0 : index
    %c0_0 = arith.constant 0 : index
    %c0_1 = arith.constant 0 : index
    %0 = vector.load %arg2[%c0, %c0_0, %c0_1] : memref<16x4x128xf32, #tpu.memory_space<vmem>>, vector<16x4x128xf32>
    %c0_2 = arith.constant 0 : index
    %c0_3 = arith.constant 0 : index
    %c0_4 = arith.constant 0 : index
    %1 = vector.load %arg3[%c0_2, %c0_3, %c0_4] : memref<16x1x128xf32, #tpu.memory_space<vmem>>, vector<16x1x128xf32>
    %2 = vector.broadcast %1 : vector<16x1x128xf32> to vector<16x4x128xf32>
    %3 = arith.addf %0, %2 : vector<16x4x128xf32>
    %4 = tpu.iota {dimensions = array<i32: 0>} : vector<16x4x128xi32>
    %5 = tpu.iota {dimensions = array<i32: 1>} : vector<16x4x128xi32>
    %6 = tpu.iota {dimensions = array<i32: 2>} : vector<16x4x128xi32>
    %c16_i32 = arith.constant 16 : i32
    %7 = arith.muli %arg0, %c16_i32 : i32
    %8 = vector.broadcast %7 : i32 to vector<16x4x128xi32>
    %9 = arith.addi %4, %8 : vector<16x4x128xi32>
    %c4_i32 = arith.constant 4 : i32
    %10 = vector.broadcast %c4_i32 : i32 to vector<16x4x128xi32>
    %11 = arith.muli %9, %10 : vector<16x4x128xi32>
    %12 = arith.addi %11, %5 : vector<16x4x128xi32>
    %c128_i32 = arith.constant 128 : i32
    %13 = vector.broadcast %c128_i32 : i32 to vector<16x4x128xi32>
    %14 = arith.muli %12, %13 : vector<16x4x128xi32>
    %15 = arith.addi %14, %6 : vector<16x4x128xi32>
    %c0_5 = arith.constant 0 : index
    %16 = memref.load %arg1[%c0_5] : memref<1xi32, #tpu.memory_space<smem>>
    %c-1640531527_i32 = arith.constant -1640531527 : i32
    %17 = arith.muli %16, %c-1640531527_i32 : i32
    %18 = vector.broadcast %17 : i32 to vector<16x4x128xi32>
    %19 = arith.xori %15, %18 : vector<16x4x128xi32>
    %c16_i32_6 = arith.constant 16 : i32
    %20 = vector.broadcast %c16_i32_6 : i32 to vector<16x4x128xi32>
    %21 = arith.shrui %19, %20 : vector<16x4x128xi32>
    %22 = arith.xori %19, %21 : vector<16x4x128xi32>
    %c2146121005_i32 = arith.constant 2146121005 : i32
    %23 = vector.broadcast %c2146121005_i32 : i32 to vector<16x4x128xi32>
    %24 = arith.muli %22, %23 : vector<16x4x128xi32>
    %c15_i32 = arith.constant 15 : i32
    %25 = vector.broadcast %c15_i32 : i32 to vector<16x4x128xi32>
    %26 = arith.shrui %24, %25 : vector<16x4x128xi32>
    %27 = arith.xori %24, %26 : vector<16x4x128xi32>
    %c-2073254261_i32 = arith.constant -2073254261 : i32
    %28 = vector.broadcast %c-2073254261_i32 : i32 to vector<16x4x128xi32>
    %29 = arith.muli %27, %28 : vector<16x4x128xi32>
    %c16_i32_7 = arith.constant 16 : i32
    %30 = vector.broadcast %c16_i32_7 : i32 to vector<16x4x128xi32>
    %31 = arith.shrui %29, %30 : vector<16x4x128xi32>
    %32 = arith.xori %29, %31 : vector<16x4x128xi32>
    %c429496730_i32 = arith.constant 429496730 : i32
    %33 = vector.broadcast %c429496730_i32 : i32 to vector<16x4x128xi32>
    %34 = arith.cmpi uge, %32, %33 : vector<16x4x128xi32>
    %cst = arith.constant 1.11111116 : f32
    %cst_8 = arith.constant 0.000000e+00 : f32
    %35 = vector.broadcast %cst : f32 to vector<16x4x128xf32>
    %36 = vector.broadcast %cst_8 : f32 to vector<16x4x128xf32>
    %37 = arith.select %34, %35, %36 : vector<16x4x128xi1>, vector<16x4x128xf32>
    %38 = arith.mulf %37, %3 : vector<16x4x128xf32>
    %c0_9 = arith.constant 0 : index
    %c0_10 = arith.constant 0 : index
    %c0_11 = arith.constant 0 : index
    %39 = vector.load %arg4[%c0_9, %c0_10, %c0_11] : memref<16x4x128xf32, #tpu.memory_space<vmem>>, vector<16x4x128xf32>
    tpu.vector_store %arg4[%c0_9, %c0_10, %c0_11], %38 {strides = array<i32>} : memref<16x4x128xf32, #tpu.memory_space<vmem>>, vector<16x4x128xf32>,
    return
  }
  func.func @transform_0(%arg0: i32, %arg1: memref<1xi32, #tpu.memory_space<smem>>) -> (i32, i32, i32) {
    %c0_i32 = arith.constant 0 : i32
    %c0_i32_0 = arith.constant 0 : i32
    %c0_i32_1 = arith.constant 0 : i32
    return %arg0, %c0_i32, %c0_i32_0 : i32, i32, i32
  }
  func.func @transform_1(%arg0: i32, %arg1: memref<1xi32, #tpu.memory_space<smem>>) -> (i32, i32, i32) {
    %c0_i32 = arith.constant 0 : i32
    %c0_i32_0 = arith.constant 0 : i32
    %c0_i32_1 = arith.constant 0 : i32
    return %arg0, %c0_i32, %c0_i32_0 : i32, i32, i32
  }
  func.func @transform_2(%arg0: i32, %arg1: memref<1xi32, #tpu.memory_space<smem>>) -> (i32, i32, i32) {
    %c0_i32 = arith.constant 0 : i32
    %c0_i32_0 = arith.constant 0 : i32
    %c0_i32_1 = arith.constant 0 : i32
    return %arg0, %c0_i32, %c0_i32_0 : i32, i32, i32
  }
}

</mosaic_0001>

<llo_original>
// kernel: tpu_custom_call.1
$region0: #{tpu_custom_call.1}
  #allocation0 [shape = 'u32[]', space=smem, size = 0x4, offset = 0x4, fixed_abs, tag = 'smem constant byte address 0x4 - core index']
  #allocation1 [shape = 'u32[144,128]{1,0:T(1,128)}', space=vmem, size = 0x12000, scoped, tag = 'internal scratch']
  #allocation2 [shape = 's32[1]{0}', space=sflag, size = 0x4, scoped, tag = 'scoped memory for tpu_custom_call.1']
  #allocation3 [shape = 's32[1]{0:T(128)S(6)}', space=smem, size = 0x200, scoped, tag = 'prefetched SMEM operand 0']
  %s0 = inlined_call_operand.<no memory space> [shape: s32[1], index: 0, kind: input, shape index: {}]
  %s1 = inlined_call_operand.hbm [shape: f32[64,4,128], index: 1, kind: input, shape index: {}]
  %s2 = inlined_call_operand.hbm [shape: f32[64,1,128], index: 2, kind: input, shape index: {}]
  %s3 = inlined_call_operand.hbm [shape: f32[64,4,128], index: 3, kind: output, shape index: {}]
  %s4 = sld [smem:[#allocation0]]
  $region49: #{tpu_custom_call.1} parent=0
    _
  %s6 = ssub.s32 1, %s4
  %s7 = scalar_select 0, %s6, %s4
  %8 = sst [smem:[#allocation3]] %s0
  $region1: #{tpu_custom_call.1} parent=0
    #allocation4 [shape = 'u8[65536]{0}', space=vmem, size = 0x10000, scoped, tag = 'input window, operand 1']
    #allocation5 [shape = 's32[2]{0}', space=sflag, size = 0x8, scoped, tag = 'scoped memory for tpu_custom_call.1']
    #allocation6 [shape = 's32[2]{0}', space=sflag, size = 0x8, scoped, tag = 'scoped memory for tpu_custom_call.1']
    #allocation7 [shape = 'u8[16384]{0}', space=vmem, size = 0x4000, scoped, tag = 'input window, operand 2']
    #allocation8 [shape = 's32[2]{0}', space=sflag, size = 0x8, scoped, tag = 'scoped memory for tpu_custom_call.1']
    #allocation9 [shape = 'u8[65536]{0}', space=vmem, size = 0x10000, scoped, tag = 'output window, operand 0']
    %9 = vsyncpa [#allocation5], 0
    %s10 = scalar_lea.sflag [#allocation5], 1
    %11 = vsyncpa %s10, 0
    %12 = vsyncpa [#allocation8], 0
    %s13 = scalar_lea.sflag [#allocation8], 1
    %14 = vsyncpa %s13, 0
    %15 = vsyncpa [#allocation6], 0
    %s16 = scalar_lea.sflag [#allocation6], 1
    %17 = vsyncpa %s16, 0
    loop: start=0, step=1, limit=6
    $region2: #{tpu_custom_call.1} parent=1 // loop_pre_header
      _
    $region3: #{tpu_custom_call.1} parent=1 // loop_header
      %s19 = sphi 0, %s23
      %p20 = scmp.ge.s32.totalorder %s19, 6
      %s29 = sphi 0, %s31
      %s32 = sphi 0, %s29
      %s33 = sphi 0, %s32
      %s49 = sphi 0, %s33
      %s55 = sphi 0, %s57
      %s58 = sphi 0, %s55
      %s59 = sphi 0, %s58
      %s75 = sphi 0, %s59
      %s81 = sphi 0, %s83
      %s84 = sphi 0, %s81
      %s85 = sphi 0, %s84
      %s101 = sphi 0, %s85
    $region4: #{tpu_custom_call.1} parent=1 // loop_header_branch
      %22 = sbr.rel (%p20) target = $region8
    $region5: #{tpu_custom_call.1} parent=1 // loop_body
      %s24 = ssub.s32 %s19, 1
      %s25 = ssub.s32 %s19, 2
      %s26 = sadd.s32 %s19, 1
      %s27 = ssub.s32 %s19, %s26
      %p28 = scmp.eq.s32.totalorder %s27, 0
      %s30 = sadd.s32 %s29, 1
      %s31 = scalar_select %p28, %s29, %s30
      %p34 = pneg %p28
      %p35 = scmp.eq.s32.totalorder %s19, 3
      %p36 = por %p34, %p35
      %p37 = scmp.ne.s32.totalorder %s29, %s32
      %p38 = scmp.eq.s32.totalorder %s19, 0
      %p39 = por %p37, %p38
      %p40 = scmp.ne.s32.totalorder %s29, %s32
      %p41 = scmp.eq.s32.totalorder %s24, 3
      %p42 = por %p40, %p41
      %p43 = scmp.ne.s32.totalorder %s32, %s33
      %p44 = scmp.eq.s32.totalorder %s24, 0
      %p45 = por %p43, %p44
      %p46 = scmp.ne.s32.totalorder %s32, %s33
      %p47 = scmp.eq.s32.totalorder %s25, 3
      %p48 = por %p46, %p47
      %p50 = scmp.ne.s32.totalorder %s33, %s49
      %p51 = scmp.eq.s32.totalorder %s25, 0
      %p52 = por %p50, %p51
      %s53 = ssub.s32 %s19, %s26
      %p54 = scmp.eq.s32.totalorder %s53, 0
      %s56 = sadd.s32 %s55, 1
      %s57 = scalar_select %p54, %s55, %s56
      %p60 = pneg %p54
      %p61 = scmp.eq.s32.totalorder %s19, 3
      %p62 = por %p60, %p61
      %p63 = scmp.ne.s32.totalorder %s55, %s58
      %p64 = scmp.eq.s32.totalorder %s19, 0
      %p65 = por %p63, %p64
      %p66 = scmp.ne.s32.totalorder %s55, %s58
      %p67 = scmp.eq.s32.totalorder %s24, 3
      %p68 = por %p66, %p67
      %p69 = scmp.ne.s32.totalorder %s58, %s59
      %p70 = scmp.eq.s32.totalorder %s24, 0
      %p71 = por %p69, %p70
      %p72 = scmp.ne.s32.totalorder %s58, %s59
      %p73 = scmp.eq.s32.totalorder %s25, 3
      %p74 = por %p72, %p73
      %p76 = scmp.ne.s32.totalorder %s59, %s75
      %p77 = scmp.eq.s32.totalorder %s25, 0
      %p78 = por %p76, %p77
      %s79 = ssub.s32 %s19, %s26
      %p80 = scmp.eq.s32.totalorder %s79, 0
      %s82 = sadd.s32 %s81, 1
      %s83 = scalar_select %p80, %s81, %s82
      %p86 = pneg %p80
      %p87 = scmp.eq.s32.totalorder %s19, 3
      %p88 = por %p86, %p87
      %p89 = scmp.ne.s32.totalorder %s81, %s84
      %p90 = scmp.eq.s32.totalorder %s19, 0
      %p91 = por %p89, %p90
      %p92 = scmp.ne.s32.totalorder %s81, %s84
      %p93 = scmp.eq.s32.totalorder %s24, 3
      %p94 = por %p92, %p93
      %p95 = scmp.ne.s32.totalorder %s84, %s85
      %p96 = scmp.eq.s32.totalorder %s24, 0
      %p97 = por %p95, %p96
      %p98 = scmp.ne.s32.totalorder %s84, %s85
      %p99 = scmp.eq.s32.totalorder %s25, 3
      %p100 = por %p98, %p99
      %p102 = scmp.ne.s32.totalorder %s85, %s101
      %p103 = scmp.eq.s32.totalorder %s25, 0
      %p104 = por %p102, %p103
      %p105 = scmp.le.s32.totalorder 1, %s19
      %p106 = scmp.lt.s32.totalorder %s19, 5
      %p107 = pnand %p105, %p106
      %p108 = pneg %p107
      // Predicated region
      $region9: #{tpu_custom_call.1} parent=5 // pred_check
        _
      $region10: #{tpu_custom_call.1} parent=5 // pred_check_branch
        %110 = sbr.rel (%p107) target = $region12
      $region11: #{tpu_custom_call.1} parent=5 // pred_region
        %s111 = ssub.s32 %s19, 1
      $region12: #{tpu_custom_call.1} parent=5 // pred_fallthru
        _
      %p112 = scmp.lt.s32.totalorder %s19, 4
      // Predicated region
      $region13: #{tpu_custom_call.1} parent=5 // pred_check
        %p113 = pneg %p112
      $region14: #{tpu_custom_call.1} parent=5 // pred_check_branch
        %115 = sbr.rel (%p113) target = $region16
      $region15: #{tpu_custom_call.1} parent=5 // pred_region
        // Predicated region
        $region17: #{tpu_custom_call.1} parent=15 // pred_check
          %p116 = pneg %p39
        $region18: #{tpu_custom_call.1} parent=15 // pred_check_branch
          %118 = sbr.rel (%p116) target = $region20
        $region19: #{tpu_custom_call.1} parent=15 // pred_region
          %s119 = sand.u32 %s29, 1
          %s120 = scalar_lea.sflag [#allocation5], %s119
          %s121 = sand.u32 %s29, 1
          %s122 = smul.addr %s121, 64
          %s123 = scalar_lea.vmem [#allocation4], %s122
          %s124 = smul.u32 16, %s19
          %s126 = ssub.s32 1024, 1024
          %127 = vsyncadd %s120, %s126
          %s128 = smul.addr %s124, 64
          %s129 = scalar_lea.hbm %s1, %s128
          %s130 = sshll.u32 %s123, 4
          %s131 = int_to_ptr.vmem [resolvable:$true] %s130
          %136 = dma.hbm_to_vmem [thread:$0]  %s129, 1024, %s131, %s120, 64, 64, 4
        $region20: #{tpu_custom_call.1} parent=15 // pred_fallthru
          _
        // Predicated region
        $region21: #{tpu_custom_call.1} parent=15 // pred_check
          %p137 = pneg %p65
        $region22: #{tpu_custom_call.1} parent=15 // pred_check_branch
          %139 = sbr.rel (%p137) target = $region24
        $region23: #{tpu_custom_call.1} parent=15 // pred_region
          %s140 = sand.u32 %s55, 1
          %s141 = scalar_lea.sflag [#allocation8], %s140
          %s142 = sand.u32 %s55, 1
          %s143 = smul.addr %s142, 16
          %s144 = scalar_lea.vmem [#allocation7], %s143
          %s145 = smul.u32 16, %s19
          %s147 = ssub.s32 256, 256
          %148 = vsyncadd %s141, %s147
          %s149 = smul.addr %s145, 16
          %s150 = scalar_lea.hbm %s2, %s149
          %s151 = sshll.u32 %s144, 4
          %s152 = int_to_ptr.vmem [resolvable:$true] %s151
          %157 = dma.hbm_to_vmem [thread:$0]  %s150, 256, %s152, %s141, 16, 16, 1
        $region24: #{tpu_custom_call.1} parent=15 // pred_fallthru
          _
      $region16: #{tpu_custom_call.1} parent=5 // pred_fallthru
        _
      %p158 = scmp.le.s32.totalorder 1, %s19
      %p159 = scmp.lt.s32.totalorder %s19, 5
      %p160 = pnand %p158, %p159
      %p161 = pneg %p160
      // Predicated region
      $region25: #{tpu_custom_call.1} parent=5 // pred_check
        _
      $region26: #{tpu_custom_call.1} parent=5 // pred_check_branch
        %163 = sbr.rel (%p160) target = $region28
      $region27: #{tpu_custom_call.1} parent=5 // pred_region
        %s164 = ssub.s32 %s19, 1
        %s165 = sand.u32 %s32, 1
        %s166 = scalar_lea.sflag [#allocation5], %s165
        %s167 = sand.u32 %s32, 1
        %s168 = smul.addr %s167, 64
        %s169 = scalar_lea.vmem [#allocation4], %s168
        // Predicated region
        $region29: #{tpu_custom_call.1} parent=27 // pred_check
          %p170 = pneg %p45
        $region30: #{tpu_custom_call.1} parent=27 // pred_check_branch
          %172 = sbr.rel (%p170) target = $region32
        $region31: #{tpu_custom_call.1} parent=27 // pred_region
          %173 = dma.done %s166, 1024
        $region32: #{tpu_custom_call.1} parent=27 // pred_fallthru
          _
        %s174 = sand.u32 %s58, 1
        %s175 = scalar_lea.sflag [#allocation8], %s174
        %s176 = sand.u32 %s58, 1
        %s177 = smul.addr %s176, 16
        %s178 = scalar_lea.vmem [#allocation7], %s177
        // Predicated region
        $region33: #{tpu_custom_call.1} parent=27 // pred_check
          %p179 = pneg %p71
        $region34: #{tpu_custom_call.1} parent=27 // pred_check_branch
          %181 = sbr.rel (%p179) target = $region36
        $region35: #{tpu_custom_call.1} parent=27 // pred_region
          %182 = dma.done %s175, 256
        $region36: #{tpu_custom_call.1} parent=27 // pred_fallthru
          _
        %s183 = sand.u32 %s32, 1
        %s184 = scalar_lea.sflag [#allocation5], %s183
        %s185 = sand.u32 %s32, 1
        %s186 = smul.addr %s185, 64
        %s187 = scalar_lea.vmem [#allocation4], %s186
        %p188 = pneg %p45
        %p189 = pneg %p42
        %s190 = sand.u32 %s58, 1
        %s191 = scalar_lea.sflag [#allocation8], %s190
        %s192 = sand.u32 %s58, 1
        %s193 = smul.addr %s192, 16
        %s194 = scalar_lea.vmem [#allocation7], %s193
        %p195 = pneg %p71
        %p196 = pneg %p68
        %p197 = pneg %p97
        %p198 = pneg %p94
        %s199 = sand.u32 %s84, 1
        %s200 = scalar_lea.sflag [#allocation6], %s199
        %s201 = sand.u32 %s84, 1
        %s202 = smul.addr %s201, 64
        %s203 = scalar_lea.vmem [#allocation9], %s202
        %s204 = smul.u32 16, %s24
        %s205 = smul.u32 16, %s24
        %s206 = smul.u32 16, %s24
        %v207 = vld [vmem:[%s169] sm:$0xf]
        %v208 = vld [vmem:[%s169 + $0x4] sm:$0xf]
        %v209 = vld [vmem:[%s169 + $0x8] sm:$0xf]
        %v210 = vld [vmem:[%s169 + $0xc] sm:$0xf]
        %v211 = vld [vmem:[%s169 + $0x10] sm:$0xf]
        %v212 = vld [vmem:[%s169 + $0x14] sm:$0xf]
        %v213 = vld [vmem:[%s169 + $0x18] sm:$0xf]
        %v214 = vld [vmem:[%s169 + $0x1c] sm:$0xf]
        %v215 = vld [vmem:[%s169 + $0x20] sm:$0xf]
        %v216 = vld [vmem:[%s169 + $0x24] sm:$0xf]
        %v217 = vld [vmem:[%s169 + $0x28] sm:$0xf]
        %v218 = vld [vmem:[%s169 + $0x2c] sm:$0xf]
        %v219 = vld [vmem:[%s169 + $0x30] sm:$0xf]
        %v220 = vld [vmem:[%s169 + $0x34] sm:$0xf]
        %v221 = vld [vmem:[%s169 + $0x38] sm:$0xf]
        %v222 = vld [vmem:[%s169 + $0x3c] sm:$0xf]
        %v223 = vld [vmem:[%s178] sm:$0x1]
        %v224 = vld [vmem:[%s178 + $0x1] sm:$0x1]
        %v225 = vld [vmem:[%s178 + $0x2] sm:$0x1]
        %v226 = vld [vmem:[%s178 + $0x3] sm:$0x1]
        %v227 = vld [vmem:[%s178 + $0x4] sm:$0x1]
        %v228 = vld [vmem:[%s178 + $0x5] sm:$0x1]
        %v229 = vld [vmem:[%s178 + $0x6] sm:$0x1]
        %v230 = vld [vmem:[%s178 + $0x7] sm:$0x1]
        %v231 = vld [vmem:[%s178 + $0x8] sm:$0x1]
        %v232 = vld [vmem:[%s178 + $0x9] sm:$0x1]
        %v233 = vld [vmem:[%s178 + $0xa] sm:$0x1]
        %v234 = vld [vmem:[%s178 + $0xb] sm:$0x1]
        %v235 = vld [vmem:[%s178 + $0xc] sm:$0x1]
        %v236 = vld [vmem:[%s178 + $0xd] sm:$0x1]
        %v237 = vld [vmem:[%s178 + $0xe] sm:$0x1]
        %v238 = vld [vmem:[%s178 + $0xf] sm:$0x1]
        %v255 = vlaneseq
        %v256 = vshrl.u32 %v255, 7
        %v257 = vsub.s32 0, %v256
        %v258 = vrot.slane %v223, %v257
        %v259 = vlaneseq
        %v260 = vshrl.u32 %v259, 7
        %v261 = vsub.s32 0, %v260
        %v262 = vrot.slane %v224, %v261
        %v263 = vlaneseq
        %v264 = vshrl.u32 %v263, 7
        %v265 = vsub.s32 0, %v264
        %v266 = vrot.slane %v225, %v265
        %v267 = vlaneseq
        %v268 = vshrl.u32 %v267, 7
        %v269 = vsub.s32 0, %v268
        %v270 = vrot.slane %v226, %v269
        %v271 = vlaneseq
        %v272 = vshrl.u32 %v271, 7
        %v273 = vsub.s32 0, %v272
        %v274 = vrot.slane %v227, %v273
        %v275 = vlaneseq
        %v276 = vshrl.u32 %v275, 7
        %v277 = vsub.s32 0, %v276
        %v278 = vrot.slane %v228, %v277
        %v279 = vlaneseq
        %v280 = vshrl.u32 %v279, 7
        %v281 = vsub.s32 0, %v280
        %v282 = vrot.slane %v229, %v281
        %v283 = vlaneseq
        %v284 = vshrl.u32 %v283, 7
        %v285 = vsub.s32 0, %v284
        %v286 = vrot.slane %v230, %v285
        %v287 = vlaneseq
        %v288 = vshrl.u32 %v287, 7
        %v289 = vsub.s32 0, %v288
        %v290 = vrot.slane %v231, %v289
        %v291 = vlaneseq
        %v292 = vshrl.u32 %v291, 7
        %v293 = vsub.s32 0, %v292
        %v294 = vrot.slane %v232, %v293
        %v295 = vlaneseq
        %v296 = vshrl.u32 %v295, 7
        %v297 = vsub.s32 0, %v296
        %v298 = vrot.slane %v233, %v297
        %v299 = vlaneseq
        %v300 = vshrl.u32 %v299, 7
        %v301 = vsub.s32 0, %v300
        %v302 = vrot.slane %v234, %v301
        %v303 = vlaneseq
        %v304 = vshrl.u32 %v303, 7
        %v305 = vsub.s32 0, %v304
        %v306 = vrot.slane %v235, %v305
        %v307 = vlaneseq
        %v308 = vshrl.u32 %v307, 7
        %v309 = vsub.s32 0, %v308
        %v310 = vrot.slane %v236, %v309
        %v311 = vlaneseq
        %v312 = vshrl.u32 %v311, 7
        %v313 = vsub.s32 0, %v312
        %v314 = vrot.slane %v237, %v313
        %v315 = vlaneseq
        %v316 = vshrl.u32 %v315, 7
        %v317 = vsub.s32 0, %v316
        %v318 = vrot.slane %v238, %v317
        %v335 = vadd.f32 %v207, %v258
        %v336 = vadd.f32 %v208, %v262
        %v337 = vadd.f32 %v209, %v266
        %v338 = vadd.f32 %v210, %v270
        %v339 = vadd.f32 %v211, %v274
        %v340 = vadd.f32 %v212, %v278
        %v341 = vadd.f32 %v213, %v282
        %v342 = vadd.f32 %v214, %v286
        %v343 = vadd.f32 %v215, %v290
        %v344 = vadd.f32 %v216, %v294
        %v345 = vadd.f32 %v217, %v298
        %v346 = vadd.f32 %v218, %v302
        %v347 = vadd.f32 %v219, %v306
        %v348 = vadd.f32 %v220, %v310
        %v349 = vadd.f32 %v221, %v314
        %v350 = vadd.f32 %v222, %v318
        %v351 = vlaneseq
        %v352 = vshrl.u32 %v351, 7
        %v353 = vlaneseq
        %v354 = vand.u32 %v353, 127
        %s355 = smul.u32 %s24, 16
        %v356 = vstv %s355
        %v357 = vadd.s32 %v356, 1
        %v358 = vadd.s32 %v356, 2
        %v359 = vadd.s32 %v356, 3
        %v360 = vadd.s32 %v356, 4
        %v361 = vadd.s32 %v356, 5
        %v362 = vadd.s32 %v356, 6
        %v363 = vadd.s32 %v356, 7
        %v364 = vadd.s32 %v356, 8
        %v365 = vadd.s32 %v356, 9
        %v366 = vadd.s32 %v356, 10
        %v367 = vadd.s32 %v356, 11
        %v368 = vadd.s32 %v356, 12
        %v369 = vadd.s32 %v356, 13
        %v370 = vadd.s32 %v356, 14
        %v371 = vadd.s32 %v356, 15
        %v372 = vmul.u32 %v356, 4
        %v373 = vmul.u32 %v357, 4
        %v374 = vmul.u32 %v358, 4
        %v375 = vmul.u32 %v359, 4
        %v376 = vmul.u32 %v360, 4
        %v377 = vmul.u32 %v361, 4
        %v378 = vmul.u32 %v362, 4
        %v379 = vmul.u32 %v363, 4
        %v380 = vmul.u32 %v364, 4
        %v381 = vmul.u32 %v365, 4
        %v382 = vmul.u32 %v366, 4
        %v383 = vmul.u32 %v367, 4
        %v384 = vmul.u32 %v368, 4
        %v385 = vmul.u32 %v369, 4
        %v386 = vmul.u32 %v370, 4
        %v387 = vmul.u32 %v371, 4
        %v388 = vadd.s32 %v372, %v352
        %v389 = vadd.s32 %v373, %v352
        %v390 = vadd.s32 %v374, %v352
        %v391 = vadd.s32 %v375, %v352
        %v392 = vadd.s32 %v376, %v352
        %v393 = vadd.s32 %v377, %v352
        %v394 = vadd.s32 %v378, %v352
        %v395 = vadd.s32 %v379, %v352
        %v396 = vadd.s32 %v380, %v352
        %v397 = vadd.s32 %v381, %v352
        %v398 = vadd.s32 %v382, %v352
        %v399 = vadd.s32 %v383, %v352
        %v400 = vadd.s32 %v384, %v352
        %v401 = vadd.s32 %v385, %v352
        %v402 = vadd.s32 %v386, %v352
        %v403 = vadd.s32 %v387, %v352
        %v404 = vmul.u32 %v388, 128
        %v405 = vmul.u32 %v389, 128
        %v406 = vmul.u32 %v390, 128
        %v407 = vmul.u32 %v391, 128
        %v408 = vmul.u32 %v392, 128
        %v409 = vmul.u32 %v393, 128
        %v410 = vmul.u32 %v394, 128
        %v411 = vmul.u32 %v395, 128
        %v412 = vmul.u32 %v396, 128
        %v413 = vmul.u32 %v397, 128
        %v414 = vmul.u32 %v398, 128
        %v415 = vmul.u32 %v399, 128
        %v416 = vmul.u32 %v400, 128
        %v417 = vmul.u32 %v401, 128
        %v418 = vmul.u32 %v402, 128
        %v419 = vmul.u32 %v403, 128
        %v420 = vadd.s32 %v404, %v354
        %v421 = vadd.s32 %v405, %v354
        %v422 = vadd.s32 %v406, %v354
        %v423 = vadd.s32 %v407, %v354
        %v424 = vadd.s32 %v408, %v354
        %v425 = vadd.s32 %v409, %v354
        %v426 = vadd.s32 %v410, %v354
        %v427 = vadd.s32 %v411, %v354
        %v428 = vadd.s32 %v412, %v354
        %v429 = vadd.s32 %v413, %v354
        %v430 = vadd.s32 %v414, %v354
        %v431 = vadd.s32 %v415, %v354
        %v432 = vadd.s32 %v416, %v354
        %v433 = vadd.s32 %v417, %v354
        %v434 = vadd.s32 %v418, %v354
        %v435 = vadd.s32 %v419, %v354
        %s436 = sld [smem:[#allocation3]]
        %s437 = smul.u32 %s436, 2654435769
        %v438 = vstv %s437
        %v439 = vxor.u32 %v420, %v438
        %v440 = vxor.u32 %v421, %v438
        %v441 = vxor.u32 %v422, %v438
        %v442 = vxor.u32 %v423, %v438
        %v443 = vxor.u32 %v424, %v438
        %v444 = vxor.u32 %v425, %v438
        %v445 = vxor.u32 %v426, %v438
        %v446 = vxor.u32 %v427, %v438
        %v447 = vxor.u32 %v428, %v438
        %v448 = vxor.u32 %v429, %v438
        %v449 = vxor.u32 %v430, %v438
        %v450 = vxor.u32 %v431, %v438
        %v451 = vxor.u32 %v432, %v438
        %v452 = vxor.u32 %v433, %v438
        %v453 = vxor.u32 %v434, %v438
        %v454 = vxor.u32 %v435, %v438
        %v455 = vshrl.u32 %v439, 16
        %v456 = vshrl.u32 %v440, 16
        %v457 = vshrl.u32 %v441, 16
        %v458 = vshrl.u32 %v442, 16
        %v459 = vshrl.u32 %v443, 16
        %v460 = vshrl.u32 %v444, 16
        %v461 = vshrl.u32 %v445, 16
        %v462 = vshrl.u32 %v446, 16
        %v463 = vshrl.u32 %v447, 16
        %v464 = vshrl.u32 %v448, 16
        %v465 = vshrl.u32 %v449, 16
        %v466 = vshrl.u32 %v450, 16
        %v467 = vshrl.u32 %v451, 16
        %v468 = vshrl.u32 %v452, 16
        %v469 = vshrl.u32 %v453, 16
        %v470 = vshrl.u32 %v454, 16
        %v471 = vxor.u32 %v439, %v455
        %v472 = vxor.u32 %v440, %v456
        %v473 = vxor.u32 %v441, %v457
        %v474 = vxor.u32 %v442, %v458
        %v475 = vxor.u32 %v443, %v459
        %v476 = vxor.u32 %v444, %v460
        %v477 = vxor.u32 %v445, %v461
        %v478 = vxor.u32 %v446, %v462
        %v479 = vxor.u32 %v447, %v463
        %v480 = vxor.u32 %v448, %v464
        %v481 = vxor.u32 %v449, %v465
        %v482 = vxor.u32 %v450, %v466
        %v483 = vxor.u32 %v451, %v467
        %v484 = vxor.u32 %v452, %v468
        %v485 = vxor.u32 %v453, %v469
        %v486 = vxor.u32 %v454, %v470
        %v487 = vmul.u32 %v471, 2146121005
        %v488 = vmul.u32 %v472, 2146121005
        %v489 = vmul.u32 %v473, 2146121005
        %v490 = vmul.u32 %v474, 2146121005
        %v491 = vmul.u32 %v475, 2146121005
        %v492 = vmul.u32 %v476, 2146121005
        %v493 = vmul.u32 %v477, 2146121005
        %v494 = vmul.u32 %v478, 2146121005
        %v495 = vmul.u32 %v479, 2146121005
        %v496 = vmul.u32 %v480, 2146121005
        %v497 = vmul.u32 %v481, 2146121005
        %v498 = vmul.u32 %v482, 2146121005
        %v499 = vmul.u32 %v483, 2146121005
        %v500 = vmul.u32 %v484, 2146121005
        %v501 = vmul.u32 %v485, 2146121005
        %v502 = vmul.u32 %v486, 2146121005
        %v503 = vshrl.u32 %v487, 15
        %v504 = vshrl.u32 %v488, 15
        %v505 = vshrl.u32 %v489, 15
        %v506 = vshrl.u32 %v490, 15
        %v507 = vshrl.u32 %v491, 15
        %v508 = vshrl.u32 %v492, 15
        %v509 = vshrl.u32 %v493, 15
        %v510 = vshrl.u32 %v494, 15
        %v511 = vshrl.u32 %v495, 15
        %v512 = vshrl.u32 %v496, 15
        %v513 = vshrl.u32 %v497, 15
        %v514 = vshrl.u32 %v498, 15
        %v515 = vshrl.u32 %v499, 15
        %v516 = vshrl.u32 %v500, 15
        %v517 = vshrl.u32 %v501, 15
        %v518 = vshrl.u32 %v502, 15
        %v519 = vxor.u32 %v487, %v503
        %v520 = vxor.u32 %v488, %v504
        %v521 = vxor.u32 %v489, %v505
        %v522 = vxor.u32 %v490, %v506
        %v523 = vxor.u32 %v491, %v507
        %v524 = vxor.u32 %v492, %v508
        %v525 = vxor.u32 %v493, %v509
        %v526 = vxor.u32 %v494, %v510
        %v527 = vxor.u32 %v495, %v511
        %v528 = vxor.u32 %v496, %v512
        %v529 = vxor.u32 %v497, %v513
        %v530 = vxor.u32 %v498, %v514
        %v531 = vxor.u32 %v499, %v515
        %v532 = vxor.u32 %v500, %v516
        %v533 = vxor.u32 %v501, %v517
        %v534 = vxor.u32 %v502, %v518
        %v535 = vmul.u32 %v519, 2221713035
        %v536 = vmul.u32 %v520, 2221713035
        %v537 = vmul.u32 %v521, 2221713035
        %v538 = vmul.u32 %v522, 2221713035
        %v539 = vmul.u32 %v523, 2221713035
        %v540 = vmul.u32 %v524, 2221713035
        %v541 = vmul.u32 %v525, 2221713035
        %v542 = vmul.u32 %v526, 2221713035
        %v543 = vmul.u32 %v527, 2221713035
        %v544 = vmul.u32 %v528, 2221713035
        %v545 = vmul.u32 %v529, 2221713035
        %v546 = vmul.u32 %v530, 2221713035
        %v547 = vmul.u32 %v531, 2221713035
        %v548 = vmul.u32 %v532, 2221713035
        %v549 = vmul.u32 %v533, 2221713035
        %v550 = vmul.u32 %v534, 2221713035
        %v551 = vshrl.u32 %v535, 16
        %v552 = vshrl.u32 %v536, 16
        %v553 = vshrl.u32 %v537, 16
        %v554 = vshrl.u32 %v538, 16
        %v555 = vshrl.u32 %v539, 16
        %v556 = vshrl.u32 %v540, 16
        %v557 = vshrl.u32 %v541, 16
        %v558 = vshrl.u32 %v542, 16
        %v559 = vshrl.u32 %v543, 16
        %v560 = vshrl.u32 %v544, 16
        %v561 = vshrl.u32 %v545, 16
        %v562 = vshrl.u32 %v546, 16
        %v563 = vshrl.u32 %v547, 16
        %v564 = vshrl.u32 %v548, 16
        %v565 = vshrl.u32 %v549, 16
        %v566 = vshrl.u32 %v550, 16
        %v567 = vxor.u32 %v535, %v551
        %v568 = vxor.u32 %v536, %v552
        %v569 = vxor.u32 %v537, %v553
        %v570 = vxor.u32 %v538, %v554
        %v571 = vxor.u32 %v539, %v555
        %v572 = vxor.u32 %v540, %v556
        %v573 = vxor.u32 %v541, %v557
        %v574 = vxor.u32 %v542, %v558
        %v575 = vxor.u32 %v543, %v559
        %v576 = vxor.u32 %v544, %v560
        %v577 = vxor.u32 %v545, %v561
        %v578 = vxor.u32 %v546, %v562
        %v579 = vxor.u32 %v547, %v563
        %v580 = vxor.u32 %v548, %v564
        %v581 = vxor.u32 %v549, %v565
        %v582 = vxor.u32 %v550, %v566
        %vm583 = vcmp.ge.u32.totalorder %v567, 429496730
        %vm584 = vcmp.ge.u32.totalorder %v568, 429496730
        %vm585 = vcmp.ge.u32.totalorder %v569, 429496730
        %vm586 = vcmp.ge.u32.totalorder %v570, 429496730
        %vm587 = vcmp.ge.u32.totalorder %v571, 429496730
        %vm588 = vcmp.ge.u32.totalorder %v572, 429496730
        %vm589 = vcmp.ge.u32.totalorder %v573, 429496730
        %vm590 = vcmp.ge.u32.totalorder %v574, 429496730
        %vm591 = vcmp.ge.u32.totalorder %v575, 429496730
        %vm592 = vcmp.ge.u32.totalorder %v576, 429496730
        %vm593 = vcmp.ge.u32.totalorder %v577, 429496730
        %vm594 = vcmp.ge.u32.totalorder %v578, 429496730
        %vm595 = vcmp.ge.u32.totalorder %v579, 429496730
        %vm596 = vcmp.ge.u32.totalorder %v580, 429496730
        %vm597 = vcmp.ge.u32.totalorder %v581, 429496730
        %vm598 = vcmp.ge.u32.totalorder %v582, 429496730
        %v599 = vsel %vm583, 1.1111112, 0.0
        %v600 = vsel %vm584, 1.1111112, 0.0
        %v601 = vsel %vm585, 1.1111112, 0.0
        %v602 = vsel %vm586, 1.1111112, 0.0
        %v603 = vsel %vm587, 1.1111112, 0.0
        %v604 = vsel %vm588, 1.1111112, 0.0
        %v605 = vsel %vm589, 1.1111112, 0.0
        %v606 = vsel %vm590, 1.1111112, 0.0
        %v607 = vsel %vm591, 1.1111112, 0.0
        %v608 = vsel %vm592, 1.1111112, 0.0
        %v609 = vsel %vm593, 1.1111112, 0.0
        %v610 = vsel %vm594, 1.1111112, 0.0
        %v611 = vsel %vm595, 1.1111112, 0.0
        %v612 = vsel %vm596, 1.1111112, 0.0
        %v613 = vsel %vm597, 1.1111112, 0.0
        %v614 = vsel %vm598, 1.1111112, 0.0
        %v615 = vmul.f32 %v599, %v335
        %v616 = vmul.f32 %v600, %v336
        %v617 = vmul.f32 %v601, %v337
        %v618 = vmul.f32 %v602, %v338
        %v619 = vmul.f32 %v603, %v339
        %v620 = vmul.f32 %v604, %v340
        %v621 = vmul.f32 %v605, %v341
        %v622 = vmul.f32 %v606, %v342
        %v623 = vmul.f32 %v607, %v343
        %v624 = vmul.f32 %v608, %v344
        %v625 = vmul.f32 %v609, %v345
        %v626 = vmul.f32 %v610, %v346
        %v627 = vmul.f32 %v611, %v347
        %v628 = vmul.f32 %v612, %v348
        %v629 = vmul.f32 %v613, %v349
        %v630 = vmul.f32 %v614, %v350
        %631 = vst [vmem:[%s203] sm:$0xf] %v615
        %632 = vst [vmem:[%s203 + $0x4] sm:$0xf] %v616
        %633 = vst [vmem:[%s203 + $0x8] sm:$0xf] %v617
        %634 = vst [vmem:[%s203 + $0xc] sm:$0xf] %v618
        %635 = vst [vmem:[%s203 + $0x10] sm:$0xf] %v619
        %636 = vst [vmem:[%s203 + $0x14] sm:$0xf] %v620
        %637 = vst [vmem:[%s203 + $0x18] sm:$0xf] %v621
        %638 = vst [vmem:[%s203 + $0x1c] sm:$0xf] %v622
        %639 = vst [vmem:[%s203 + $0x20] sm:$0xf] %v623
        %640 = vst [vmem:[%s203 + $0x24] sm:$0xf] %v624
        %641 = vst [vmem:[%s203 + $0x28] sm:$0xf] %v625
        %642 = vst [vmem:[%s203 + $0x2c] sm:$0xf] %v626
        %643 = vst [vmem:[%s203 + $0x30] sm:$0xf] %v627
        %644 = vst [vmem:[%s203 + $0x34] sm:$0xf] %v628
        %645 = vst [vmem:[%s203 + $0x38] sm:$0xf] %v629
        %646 = vst [vmem:[%s203 + $0x3c] sm:$0xf] %v630
        %s647 = sand.u32 %s84, 1
        %s648 = scalar_lea.sflag [#allocation6], %s647
        %s649 = sand.u32 %s84, 1
        %s650 = smul.addr %s649, 64
        %s651 = scalar_lea.vmem [#allocation9], %s650
        // Predicated region
        $region37: #{tpu_custom_call.1} parent=27 // pred_check
          %p652 = pneg %p94
        $region38: #{tpu_custom_call.1} parent=27 // pred_check_branch
          %654 = sbr.rel (%p652) target = $region40
        $region39: #{tpu_custom_call.1} parent=27 // pred_region
          %s655 = smul.u32 16, %s24
          %s657 = ssub.s32 1024, 1024
          %658 = vsyncadd %s648, %s657
          %s659 = smul.addr %s655, 64
          %s660 = scalar_lea.hbm %s3, %s659
          %s661 = sshll.u32 %s651, 4
          %s662 = int_to_ptr.vmem [resolvable:$true] %s661
          %667 = dma.vmem_to_hbm [thread:$0]  %s662, 1024, %s660, %s648, 64, 64, 4
        $region40: #{tpu_custom_call.1} parent=27 // pred_fallthru
          _
      $region28: #{tpu_custom_call.1} parent=5 // pred_fallthru
        _
      %p668 = scmp.le.s32.totalorder 2, %s19
      // Predicated region
      $region41: #{tpu_custom_call.1} parent=5 // pred_check
        %p669 = pneg %p668
      $region42: #{tpu_custom_call.1} parent=5 // pred_check_branch
        %671 = sbr.rel (%p669) target = $region44
      $region43: #{tpu_custom_call.1} parent=5 // pred_region
        %s672 = ssub.s32 %s19, 2
        // Predicated region
        $region45: #{tpu_custom_call.1} parent=43 // pred_check
          %p673 = pneg %p100
        $region46: #{tpu_custom_call.1} parent=43 // pred_check_branch
          %675 = sbr.rel (%p673) target = $region48
        $region47: #{tpu_custom_call.1} parent=43 // pred_region
          %s676 = sand.u32 %s85, 1
          %s677 = scalar_lea.sflag [#allocation6], %s676
          %s678 = sand.u32 %s85, 1
          %s679 = smul.addr %s678, 64
          %s680 = scalar_lea.vmem [#allocation9], %s679
          %681 = dma.done %s677, 1024
        $region48: #{tpu_custom_call.1} parent=43 // pred_fallthru
          _
      $region44: #{tpu_custom_call.1} parent=5 // pred_fallthru
        _
    $region6: #{tpu_custom_call.1} parent=1 // loop_footer
      %s23 = sadd.s32 1, %s19
    $region7: #{tpu_custom_call.1} parent=1 // loop_footer_branch
      %18 = sbr.rel target = $region3
    $region8: #{tpu_custom_call.1} parent=1 // loop_exit
      _
    %682 = vsyncpa [#allocation5], 1
    %s683 = scalar_lea.sflag [#allocation5], 1
    %684 = vsyncpa %s683, 1
    %685 = vsyncpa [#allocation8], 1
    %s686 = scalar_lea.sflag [#allocation8], 1
    %687 = vsyncpa %s686, 1
    %688 = vsyncpa [#allocation6], 1
    %s689 = scalar_lea.sflag [#allocation6], 1
    %690 = vsyncpa %s689, 1

</llo_original>
